<compile_context>
chip_gen: v6e
topology: v6e:2x2x1
jax: 0.10.0
libtpu: 0.0.40
codegen_flags: <defaults>
</compile_context>

<pallas_src>
import jax
import jax.numpy as jnp
from jax.experimental import pallas as pl
from jax.experimental.pallas import tpu as pltpu


def _round_up(x: int, m: int) -> int:
    return ((x + m - 1) // m) * m


def _make_spmm_kernel(embeds_resident: bool, tk: int):
    """out[i, j] += adj[i, k] @ embeds[k, j], f32 accumulation in out_ref."""

    def kernel(adj_ref, emb_ref, out_ref):
        k = pl.program_id(2)

        @pl.when(k == 0)
        def _():
            out_ref[...] = jnp.zeros_like(out_ref)

        if embeds_resident:
            # emb_ref holds the full (K_pad, tn) slab; slice the k-th chunk.
            off = pl.multiple_of(k * tk, tk)
            emb_tile = emb_ref[pl.ds(off, tk), :]
        else:
            emb_tile = emb_ref[...]

        out_ref[...] += jnp.dot(
            adj_ref[...], emb_tile, preferred_element_type=jnp.float32
        )

    return kernel


def gcn_layer(
    adj: jax.Array,
    embeds: jax.Array,
    *,
    tm: int = 512,
    tk: int = 512,
    compute_dtype=jnp.bfloat16,
    resident_embeds_budget_bytes: int = 24 * 1024 * 1024,
):
    """out = adj @ embeds  (dense equivalent of torch.spmm)."""
    M, K = adj.shape
    K2, D = embeds.shape
    assert K == K2, "adj columns must match embeds rows"

    out_dtype = embeds.dtype
    itemsize = jnp.dtype(compute_dtype).itemsize

    # Lane-dim tile for embeds / output.
    tn = min(512, _round_up(D, 128))
    D_pad = _round_up(D, tn)

    # Row-block tile; keep >= 2 i-blocks when possible (megacore on v7x).
    tm = min(tm, _round_up(M, 128))
    if _round_up(M, tm) == tm and tm > 128:
        tm = max(128, _round_up(tm // 2, 128))
    M_pad = _round_up(M, tm)

    # Contraction tile.
    tk = min(tk, _round_up(K, 128))
    K_pad = _round_up(K, tk)

    # Hold the full embeds slab resident in VMEM when it fits (x2 for buffering).
    embeds_resident = (2 * K_pad * tn * itemsize) <= resident_embeds_budget_bytes

    # Zero-pad (safe: padded zeros contribute nothing) and cast to compute dtype.
    adj_p = adj.astype(compute_dtype)
    if (M_pad, K_pad) != (M, K):
        adj_p = jnp.pad(adj_p, ((0, M_pad - M), (0, K_pad - K)))
    emb_p = embeds.astype(compute_dtype)
    if (K_pad, D_pad) != (K, D):
        emb_p = jnp.pad(emb_p, ((0, K_pad - K), (0, D_pad - D)))

    grid = (M_pad // tm, D_pad // tn, K_pad // tk)

    if embeds_resident:
        # Constant index across i and k => DMA'd once per j (usually once total).
        emb_spec = pl.BlockSpec((K_pad, tn), lambda i, j, k: (0, j))
        emb_block_rows = K_pad
    else:
        emb_spec = pl.BlockSpec((tk, tn), lambda i, j, k: (k, j))
        emb_block_rows = tk

    # VMEM budget estimate (double-buffered inputs + f32 output block).
    vmem_est = (
        2 * tm * tk * itemsize
        + 2 * emb_block_rows * tn * itemsize
        + 2 * tm * tn * 4
    )
    vmem_limit = int(min(64 * 1024 * 1024, max(2 * vmem_est, 16 * 1024 * 1024)))

    cost = pl.CostEstimate(
        flops=2 * M_pad * K_pad * D_pad,
        transcendentals=0,
        bytes_accessed=(M_pad * K_pad + K_pad * D_pad) * itemsize
        + M_pad * D_pad * 4,
    )

    out = pl.pallas_call(
        _make_spmm_kernel(embeds_resident, tk),
        out_shape=jax.ShapeDtypeStruct((M_pad, D_pad), jnp.float32),
        grid_spec=pltpu.PrefetchScalarGridSpec(
            num_scalar_prefetch=0,
            grid=grid,
            in_specs=[
                pl.BlockSpec((tm, tk), lambda i, j, k: (i, k)),  # adj tile
                emb_spec,                                        # embeds
            ],
            out_specs=pl.BlockSpec((tm, tn), lambda i, j, k: (i, j)),
        ),
        compiler_params=pltpu.CompilerParams(
            dimension_semantics=("parallel", "parallel", "arbitrary"),
            vmem_limit_bytes=vmem_limit,
        ),
        cost_estimate=cost,
    )(adj_p, emb_p)

    return out[:M, :D].astype(out_dtype)


if __name__ == "__main__":
    key = jax.random.PRNGKey(0)
    k_adj, k_emb = jax.random.split(key)

    N_NODES = 256   # number of graph nodes
    HIDDEN = 128    # embedding dim

    # Deterministic synthetic sparse adjacency (dense representation),
    # symmetrically normalized like a typical GCN propagation matrix.
    mask = (jax.random.uniform(k_adj, (N_NODES, N_NODES)) < 0.05).astype(jnp.float32)
    adj_raw = mask + jnp.eye(N_NODES, dtype=jnp.float32)  # add self-loops
    deg = jnp.sum(adj_raw, axis=1, keepdims=True)
    d_inv_sqrt = 1.0 / jnp.sqrt(jnp.maximum(deg, 1.0))
    adj = d_inv_sqrt * adj_raw * d_inv_sqrt.T  # (N, N) float32

    embeds = jax.random.normal(k_emb, (N_NODES, HIDDEN), dtype=jnp.float32)

    out = gcn_layer(adj, embeds)
    out = jax.block_until_ready(out)

    # Correctness check against plain JAX reference (same semantics as t.spmm).
    # bf16 inputs with f32 accumulation => ~1e-2 relative error vs f32 reference.
    ref = adj @ embeds
    assert out.shape == (N_NODES, HIDDEN)
    rel_err = jnp.max(jnp.abs(out - ref)) / (jnp.max(jnp.abs(ref)) + 1e-6)
    assert rel_err < 2e-2, f"mismatch vs reference (rel err {rel_err})"

    print("KERNEL_OK")
</pallas_src>

<mosaic_0001>
module attributes {stable_mosaic.version = 11 : i64} {
  func.func @kernel(%arg0: i32, %arg1: i32, %arg2: i32, %arg3: memref<128x256xbf16, #tpu.memory_space<vmem>>, %arg4: memref<256x128xbf16, #tpu.memory_space<vmem>>, %arg5: memref<128x128xf32, #tpu.memory_space<vmem>>) attributes {dimension_semantics = [#tpu.dimension_semantics<parallel>, #tpu.dimension_semantics<parallel>, #tpu.dimension_semantics<arbitrary>], iteration_bounds = array<i64: 2, 1, 1>, scalar_prefetch = 0 : i64, scratch_operands = 0 : i64, tpu.core_type = #tpu.core_type<tc>, window_params = [{transform_indices = @transform_0, window_bounds = array<i64: 128, 256>}, {transform_indices = @transform_1, window_bounds = array<i64: 256, 128>}, {transform_indices = @transform_2, window_bounds = array<i64: 128, 128>}]} {
    %c0_i32 = arith.constant 0 : i32
    %0 = arith.cmpi eq, %arg2, %c0_i32 : i32
    %1 = arith.extui %0 : i1 to i32
    %c0_i32_0 = arith.constant 0 : i32
    %2 = arith.cmpi ne, %1, %c0_i32_0 : i32
    scf.if %2 {
      %cst_7 = arith.constant 0.000000e+00 : f32
      %12 = vector.broadcast %cst_7 : f32 to vector<128x128xf32>
      %c0_8 = arith.constant 0 : index
      %c0_9 = arith.constant 0 : index
      %13 = vector.load %arg5[%c0_8, %c0_9] : memref<128x128xf32, #tpu.memory_space<vmem>>, vector<128x128xf32>
      tpu.vector_store %arg5[%c0_8, %c0_9], %12 {strides = array<i32>} : memref<128x128xf32, #tpu.memory_space<vmem>>, vector<128x128xf32>,
    } else {
    }
    %c256_i32 = arith.constant 256 : i32
    %3 = arith.muli %arg2, %c256_i32 : i32
    %4 = tpu.assume_multiple %3, 256 : i32
    %5 = arith.index_cast %4 : i32 to index
    %c0 = arith.constant 0 : index
    %6 = vector.load %arg4[%5, %c0] : memref<256x128xbf16, #tpu.memory_space<vmem>>, vector<256x128xbf16>
    %c0_1 = arith.constant 0 : index
    %c0_2 = arith.constant 0 : index
    %7 = vector.load %arg5[%c0_1, %c0_2] : memref<128x128xf32, #tpu.memory_space<vmem>>, vector<128x128xf32>
    %c0_3 = arith.constant 0 : index
    %c0_4 = arith.constant 0 : index
    %8 = vector.load %arg3[%c0_3, %c0_4] : memref<128x256xbf16, #tpu.memory_space<vmem>>, vector<128x256xbf16>
    %cst = arith.constant dense<0.000000e+00> : vector<128x128xf32>
    %9 = tpu.matmul %8, %6, %cst {dimension_numbers = #tpu.dot_dimension_numbers<[1], [0], [0], [1], [0, 0, 1, 1], [], []>} : vector<128x256xbf16>, vector<256x128xbf16>, vector<128x128xf32> -> vector<128x128xf32>
    %10 = arith.addf %7, %9 : vector<128x128xf32>
    %c0_5 = arith.constant 0 : index
    %c0_6 = arith.constant 0 : index
    %11 = vector.load %arg5[%c0_5, %c0_6] : memref<128x128xf32, #tpu.memory_space<vmem>>, vector<128x128xf32>
    tpu.vector_store %arg5[%c0_5, %c0_6], %10 {strides = array<i32>} : memref<128x128xf32, #tpu.memory_space<vmem>>, vector<128x128xf32>,
    return
  }
  func.func @transform_0(%arg0: i32, %arg1: i32, %arg2: i32) -> (i32, i32) {
    %c0_i32 = arith.constant 0 : i32
    return %arg0, %arg2 : i32, i32
  }
  func.func @transform_1(%arg0: i32, %arg1: i32, %arg2: i32) -> (i32, i32) {
    %c0_i32 = arith.constant 0 : i32
    %c0_i32_0 = arith.constant 0 : i32
    return %c0_i32, %arg1 : i32, i32
  }
  func.func @transform_2(%arg0: i32, %arg1: i32, %arg2: i32) -> (i32, i32) {
    %c0_i32 = arith.constant 0 : i32
    return %arg0, %arg1 : i32, i32
  }
}

</mosaic_0001>

<llo_original>
// kernel: tpu_custom_call.1
$region0: #{tpu_custom_call.1}
  #allocation0 [shape = 'u32[]', space=smem, size = 0x4, offset = 0x4, fixed_abs, tag = 'smem constant byte address 0x4 - core index']
  #allocation1 [shape = 'u32[144,128]{1,0:T(1,128)}', space=vmem, size = 0x12000, scoped, tag = 'internal scratch']
  %s0 = inlined_call_operand.hbm [shape: bf16[256,256], index: 0, kind: input, shape index: {}]
  %s1 = inlined_call_operand.hbm [shape: bf16[256,128], index: 1, kind: input, shape index: {}]
  %s2 = inlined_call_operand.hbm [shape: f32[256,128], index: 2, kind: output, shape index: {}]
  %s3 = sld [smem:[#allocation0]]
  $region53: #{tpu_custom_call.1} parent=0
    _
  %s5 = ssub.s32 1, %s3
  %s6 = scalar_select 0, %s5, %s3
  $region1: #{tpu_custom_call.1} parent=0
    #allocation2 [shape = 'u8[131072]{0}', space=vmem, size = 0x20000, scoped, tag = 'input window, operand 0']
    #allocation3 [shape = 's32[2]{0}', space=sflag, size = 0x8, scoped, tag = 'scoped memory for tpu_custom_call.1']
    #allocation4 [shape = 's32[2]{0}', space=sflag, size = 0x8, scoped, tag = 'scoped memory for tpu_custom_call.1']
    #allocation5 [shape = 'u8[65536]{0}', space=vmem, size = 0x10000, scoped, tag = 'input window, operand 1, single buffered']
    #allocation6 [shape = 's32[1]{0}', space=sflag, size = 0x4, scoped, tag = 'scoped memory for tpu_custom_call.1']
    #allocation7 [shape = 'u8[131072]{0}', space=vmem, size = 0x20000, scoped, tag = 'output window, operand 0']
    %7 = vsyncpa [#allocation3], 0
    %s8 = scalar_lea.sflag [#allocation3], 1
    %9 = vsyncpa %s8, 0
    %10 = vsyncpa [#allocation6], 0
    %11 = vsyncpa [#allocation4], 0
    %s12 = scalar_lea.sflag [#allocation4], 1
    %13 = vsyncpa %s12, 0
    loop: start=0, step=1, limit=4
    $region2: #{tpu_custom_call.1} parent=1 // loop_pre_header
      _
    $region3: #{tpu_custom_call.1} parent=1 // loop_header
      %s15 = sphi 0, %s19
      %p16 = scmp.ge.s32.totalorder %s15, 4
      %s22 = sphi 0, %s41
      %s23 = sphi 0, %s37
      %s24 = sphi 0, %s33
      %s25 = sphi 0, %s22
      %s26 = sphi 0, %s23
      %s27 = sphi 0, %s24
      %s28 = sphi 0, %s25
      %s29 = sphi 0, %s26
      %s30 = sphi 0, %s27
      %s46 = sphi 0, %s48
      %s49 = sphi 0, %s46
      %s50 = sphi 0, %s49
      %s66 = sphi 0, %s50
      %s72 = sphi 0, %s74
      %s75 = sphi 0, %s72
      %s76 = sphi 0, %s75
      %s92 = sphi 0, %s76
      %s100 = sphi 0, %s102
      %s103 = sphi 0, %s100
      %s104 = sphi 0, %s103
      %s120 = sphi 0, %s104
    $region4: #{tpu_custom_call.1} parent=1 // loop_header_branch
      %18 = sbr.rel (%p16) target = $region8
    $region5: #{tpu_custom_call.1} parent=1 // loop_body
      %s20 = ssub.s32 %s15, 1
      %s21 = ssub.s32 %s15, 2
      %s31 = sadd.s32 1, %s24
      %p32 = scmp.ge.s32.totalorder %s31, 1
      %s33 = scalar_select %p32, 0, %s31
      %s34 = sadd.s32 1, %s23
      %s35 = scalar_select %p32, %s34, %s23
      %p36 = scmp.ge.s32.totalorder %s35, 1
      %s37 = scalar_select %p36, 0, %s35
      %s38 = sadd.s32 1, %s22
      %s39 = scalar_select %p36, %s38, %s22
      %p40 = scmp.ge.s32.totalorder %s39, 2
      %s41 = scalar_select %p40, 0, %s39
      %s42 = ssub.s32 %s22, %s41
      %s43 = ssub.s32 %s24, %s33
      %s44 = sor.u32 %s42, %s43
      %p45 = scmp.eq.s32.totalorder %s44, 0
      %s47 = sadd.s32 %s46, 1
      %s48 = scalar_select %p45, %s46, %s47
      %p51 = pneg %p45
      %p52 = scmp.eq.s32.totalorder %s15, 1
      %p53 = por %p51, %p52
      %p54 = scmp.ne.s32.totalorder %s46, %s49
      %p55 = scmp.eq.s32.totalorder %s15, 0
      %p56 = por %p54, %p55
      %p57 = scmp.ne.s32.totalorder %s46, %s49
      %p58 = scmp.eq.s32.totalorder %s20, 1
      %p59 = por %p57, %p58
      %p60 = scmp.ne.s32.totalorder %s49, %s50
      %p61 = scmp.eq.s32.totalorder %s20, 0
      %p62 = por %p60, %p61
      %p63 = scmp.ne.s32.totalorder %s49, %s50
      %p64 = scmp.eq.s32.totalorder %s21, 1
      %p65 = por %p63, %p64
      %p67 = scmp.ne.s32.totalorder %s50, %s66
      %p68 = scmp.eq.s32.totalorder %s21, 0
      %p69 = por %p67, %p68
      %s70 = ssub.s32 %s23, %s37
      %p71 = scmp.eq.s32.totalorder %s70, 0
      %s73 = sadd.s32 %s72, 1
      %s74 = scalar_select %p71, %s72, %s73
      %p77 = pneg %p71
      %p78 = scmp.eq.s32.totalorder %s15, 1
      %p79 = por %p77, %p78
      %p80 = scmp.ne.s32.totalorder %s72, %s75
      %p81 = scmp.eq.s32.totalorder %s15, 0
      %p82 = por %p80, %p81
      %p83 = scmp.ne.s32.totalorder %s72, %s75
      %p84 = scmp.eq.s32.totalorder %s20, 1
      %p85 = por %p83, %p84
      %p86 = scmp.ne.s32.totalorder %s75, %s76
      %p87 = scmp.eq.s32.totalorder %s20, 0
      %p88 = por %p86, %p87
      %p89 = scmp.ne.s32.totalorder %s75, %s76
      %p90 = scmp.eq.s32.totalorder %s21, 1
      %p91 = por %p89, %p90
      %p93 = scmp.ne.s32.totalorder %s76, %s92
      %p94 = scmp.eq.s32.totalorder %s21, 0
      %p95 = por %p93, %p94
      %s96 = ssub.s32 %s22, %s41
      %s97 = ssub.s32 %s23, %s37
      %s98 = sor.u32 %s96, %s97
      %p99 = scmp.eq.s32.totalorder %s98, 0
      %s101 = sadd.s32 %s100, 1
      %s102 = scalar_select %p99, %s100, %s101
      %p105 = pneg %p99
      %p106 = scmp.eq.s32.totalorder %s15, 1
      %p107 = por %p105, %p106
      %p108 = scmp.ne.s32.totalorder %s100, %s103
      %p109 = scmp.eq.s32.totalorder %s15, 0
      %p110 = por %p108, %p109
      %p111 = scmp.ne.s32.totalorder %s100, %s103
      %p112 = scmp.eq.s32.totalorder %s20, 1
      %p113 = por %p111, %p112
      %p114 = scmp.ne.s32.totalorder %s103, %s104
      %p115 = scmp.eq.s32.totalorder %s20, 0
      %p116 = por %p114, %p115
      %p117 = scmp.ne.s32.totalorder %s103, %s104
      %p118 = scmp.eq.s32.totalorder %s21, 1
      %p119 = por %p117, %p118
      %p121 = scmp.ne.s32.totalorder %s104, %s120
      %p122 = scmp.eq.s32.totalorder %s21, 0
      %p123 = por %p121, %p122
      %p124 = scmp.le.s32.totalorder 1, %s15
      %p125 = scmp.lt.s32.totalorder %s15, 3
      %p126 = pnand %p124, %p125
      %p127 = pneg %p126
      // Predicated region
      $region9: #{tpu_custom_call.1} parent=5 // pred_check
        _
      $region10: #{tpu_custom_call.1} parent=5 // pred_check_branch
        %129 = sbr.rel (%p126) target = $region12
      $region11: #{tpu_custom_call.1} parent=5 // pred_region
        %s130 = ssub.s32 %s15, 1
        // Predicated region
        $region13: #{tpu_custom_call.1} parent=11 // pred_check
          %p131 = pneg %p88
        $region14: #{tpu_custom_call.1} parent=11 // pred_check_branch
          %133 = sbr.rel (%p131) target = $region16
        $region15: #{tpu_custom_call.1} parent=11 // pred_region
          %s135 = ssub.s32 2048, 2048
          %136 = vsyncadd [#allocation6], %s135
          %s137 = smul.addr %s26, 64
          %s138 = scalar_lea.hbm %s1, %s137
          %s139 = sshll.u32 [#allocation5], 4
          %s140 = int_to_ptr.vmem [resolvable:$true] %s139
          %145 = dma.hbm_to_vmem [thread:$0]  %s138, 2048, %s140, [#allocation6], 64, 64, 4
        $region16: #{tpu_custom_call.1} parent=11 // pred_fallthru
          _
      $region12: #{tpu_custom_call.1} parent=5 // pred_fallthru
        _
      %p146 = scmp.lt.s32.totalorder %s15, 2
      // Predicated region
      $region17: #{tpu_custom_call.1} parent=5 // pred_check
        %p147 = pneg %p146
      $region18: #{tpu_custom_call.1} parent=5 // pred_check_branch
        %149 = sbr.rel (%p147) target = $region20
      $region19: #{tpu_custom_call.1} parent=5 // pred_region
        // Predicated region
        $region21: #{tpu_custom_call.1} parent=19 // pred_check
          %p150 = pneg %p56
        $region22: #{tpu_custom_call.1} parent=19 // pred_check_branch
          %152 = sbr.rel (%p150) target = $region24
        $region23: #{tpu_custom_call.1} parent=19 // pred_region
          %s153 = sand.u32 %s46, 1
          %s154 = scalar_lea.sflag [#allocation3], %s153
          %s155 = sand.u32 %s46, 1
          %s156 = smul.addr %s155, 128
          %s157 = scalar_lea.vmem [#allocation2], %s156
          %s158 = smul.u32 16, %s22
          %s159 = smul.u32 2, %s24
          %s161 = ssub.s32 2048, 2048
          %162 = vsyncadd %s154, %s161
          %s163 = smul.addr %s158, 2
          %s164 = sadd.s32 %s159, %s163
          %s165 = smul.addr %s164, 64
          %s166 = scalar_lea.hbm %s0, %s165
          %s167 = sshll.u32 %s157, 4
          %s168 = int_to_ptr.vmem [resolvable:$true] %s167
          %173 = dma.hbm_to_vmem [thread:$0]  %s166, 2048, %s168, %s154, 128, 128, 8
        $region24: #{tpu_custom_call.1} parent=19 // pred_fallthru
          _
      $region20: #{tpu_custom_call.1} parent=5 // pred_fallthru
        _
      %p174 = scmp.le.s32.totalorder 1, %s15
      %p175 = scmp.lt.s32.totalorder %s15, 3
      %p176 = pnand %p174, %p175
      %p177 = pneg %p176
      // Predicated region
      $region25: #{tpu_custom_call.1} parent=5 // pred_check
        _
      $region26: #{tpu_custom_call.1} parent=5 // pred_check_branch
        %179 = sbr.rel (%p176) target = $region28
      $region27: #{tpu_custom_call.1} parent=5 // pred_region
        %s180 = ssub.s32 %s15, 1
        %s181 = sand.u32 %s49, 1
        %s182 = scalar_lea.sflag [#allocation3], %s181
        %s183 = sand.u32 %s49, 1
        %s184 = smul.addr %s183, 128
        %s185 = scalar_lea.vmem [#allocation2], %s184
        // Predicated region
        $region29: #{tpu_custom_call.1} parent=27 // pred_check
          %p186 = pneg %p62
        $region30: #{tpu_custom_call.1} parent=27 // pred_check_branch
          %188 = sbr.rel (%p186) target = $region32
        $region31: #{tpu_custom_call.1} parent=27 // pred_region
          %189 = dma.done %s182, 2048
        $region32: #{tpu_custom_call.1} parent=27 // pred_fallthru
          _
        // Predicated region
        $region33: #{tpu_custom_call.1} parent=27 // pred_check
          %p190 = pneg %p88
        $region34: #{tpu_custom_call.1} parent=27 // pred_check_branch
          %192 = sbr.rel (%p190) target = $region36
        $region35: #{tpu_custom_call.1} parent=27 // pred_region
          %193 = dma.done [#allocation6], 2048
        $region36: #{tpu_custom_call.1} parent=27 // pred_fallthru
          _
        %s194 = sand.u32 %s49, 1
        %s195 = scalar_lea.sflag [#allocation3], %s194
        %s196 = sand.u32 %s49, 1
        %s197 = smul.addr %s196, 128
        %s198 = scalar_lea.vmem [#allocation2], %s197
        %p199 = pneg %p62
        %p200 = pneg %p59
        %p201 = pneg %p88
        %p202 = pneg %p85
        %p203 = pneg %p116
        %p204 = pneg %p113
        %s205 = sand.u32 %s103, 1
        %s206 = scalar_lea.sflag [#allocation4], %s205
        %s207 = sand.u32 %s103, 1
        %s208 = smul.addr %s207, 128
        %s209 = scalar_lea.vmem [#allocation7], %s208
        %s210 = smul.u32 16, %s25
        %s211 = smul.u32 2, %s27
        %s212 = smul.u32 16, %s25
        %p214 = scmp.eq.s32.totalorder %s27, 0
        // Predicated region
        $region37: #{tpu_custom_call.1} parent=27 // pred_check
          %p215 = pneg %p214
        $region38: #{tpu_custom_call.1} parent=27 // pred_check_branch
          %217 = sbr.rel (%p215) target = $region40
        $region39: #{tpu_custom_call.1} parent=27 // pred_region
          %218 = vst [vmem:[%s209] sm:$0xff] 0.0
          %219 = vst [vmem:[%s209 + $0x8] sm:$0xff] 0.0
          %220 = vst [vmem:[%s209 + $0x10] sm:$0xff] 0.0
          %221 = vst [vmem:[%s209 + $0x18] sm:$0xff] 0.0
          %222 = vst [vmem:[%s209 + $0x20] sm:$0xff] 0.0
          %223 = vst [vmem:[%s209 + $0x28] sm:$0xff] 0.0
          %224 = vst [vmem:[%s209 + $0x30] sm:$0xff] 0.0
          %225 = vst [vmem:[%s209 + $0x38] sm:$0xff] 0.0
          %226 = vst [vmem:[%s209 + $0x40] sm:$0xff] 0.0
          %227 = vst [vmem:[%s209 + $0x48] sm:$0xff] 0.0
          %228 = vst [vmem:[%s209 + $0x50] sm:$0xff] 0.0
          %229 = vst [vmem:[%s209 + $0x58] sm:$0xff] 0.0
          %230 = vst [vmem:[%s209 + $0x60] sm:$0xff] 0.0
          %231 = vst [vmem:[%s209 + $0x68] sm:$0xff] 0.0
          %232 = vst [vmem:[%s209 + $0x70] sm:$0xff] 0.0
          %233 = vst [vmem:[%s209 + $0x78] sm:$0xff] 0.0
        $region40: #{tpu_custom_call.1} parent=27 // pred_fallthru
          _
        %s234 = smul.u32 %s27, 256
        %s235 = sshra.s32 %s234, 3
        %s236 = sand.u32 %s234, 7
        %s237 = smul.addr %s235, 4
        %s238 = scalar_lea.vmem [#allocation5], %s237
        %v239 = vld [vmem:[%s238] sm:$0xf]
        %v240 = vld [vmem:[%s238 + $0x4] sm:$0xf]
        %v241 = vld [vmem:[%s238 + $0x8] sm:$0xf]
        %v242 = vld [vmem:[%s238 + $0xc] sm:$0xf]
        %v243 = vld [vmem:[%s238 + $0x10] sm:$0xf]
        %v244 = vld [vmem:[%s238 + $0x14] sm:$0xf]
        %v245 = vld [vmem:[%s238 + $0x18] sm:$0xf]
        %v246 = vld [vmem:[%s238 + $0x1c] sm:$0xf]
        %v247 = vld [vmem:[%s238 + $0x20] sm:$0xf]
        %v248 = vld [vmem:[%s238 + $0x24] sm:$0xf]
        %v249 = vld [vmem:[%s238 + $0x28] sm:$0xf]
        %v250 = vld [vmem:[%s238 + $0x2c] sm:$0xf]
        %v251 = vld [vmem:[%s238 + $0x30] sm:$0xf]
        %v252 = vld [vmem:[%s238 + $0x34] sm:$0xf]
        %v253 = vld [vmem:[%s238 + $0x38] sm:$0xf]
        %v254 = vld [vmem:[%s238 + $0x3c] sm:$0xf]
        %v255 = vld [vmem:[%s238 + $0x40] sm:$0xf]
        %v256 = vld [vmem:[%s238 + $0x44] sm:$0xf]
        %v257 = vld [vmem:[%s238 + $0x48] sm:$0xf]
        %v258 = vld [vmem:[%s238 + $0x4c] sm:$0xf]
        %v259 = vld [vmem:[%s238 + $0x50] sm:$0xf]
        %v260 = vld [vmem:[%s238 + $0x54] sm:$0xf]
        %v261 = vld [vmem:[%s238 + $0x58] sm:$0xf]
        %v262 = vld [vmem:[%s238 + $0x5c] sm:$0xf]
        %v263 = vld [vmem:[%s238 + $0x60] sm:$0xf]
        %v264 = vld [vmem:[%s238 + $0x64] sm:$0xf]
        %v265 = vld [vmem:[%s238 + $0x68] sm:$0xf]
        %v266 = vld [vmem:[%s238 + $0x6c] sm:$0xf]
        %v267 = vld [vmem:[%s238 + $0x70] sm:$0xf]
        %v268 = vld [vmem:[%s238 + $0x74] sm:$0xf]
        %v269 = vld [vmem:[%s238 + $0x78] sm:$0xf]
        %v270 = vld [vmem:[%s238 + $0x7c] sm:$0xf]
        %v271 = vld [vmem:[%s209] sm:$0xff]
        %v272 = vld [vmem:[%s209 + $0x8] sm:$0xff]
        %v273 = vld [vmem:[%s209 + $0x10] sm:$0xff]
        %v274 = vld [vmem:[%s209 + $0x18] sm:$0xff]
        %v275 = vld [vmem:[%s209 + $0x20] sm:$0xff]
        %v276 = vld [vmem:[%s209 + $0x28] sm:$0xff]
        %v277 = vld [vmem:[%s209 + $0x30] sm:$0xff]
        %v278 = vld [vmem:[%s209 + $0x38] sm:$0xff]
        %v279 = vld [vmem:[%s209 + $0x40] sm:$0xff]
        %v280 = vld [vmem:[%s209 + $0x48] sm:$0xff]
        %v281 = vld [vmem:[%s209 + $0x50] sm:$0xff]
        %v282 = vld [vmem:[%s209 + $0x58] sm:$0xff]
        %v283 = vld [vmem:[%s209 + $0x60] sm:$0xff]
        %v284 = vld [vmem:[%s209 + $0x68] sm:$0xff]
        %v285 = vld [vmem:[%s209 + $0x70] sm:$0xff]
        %v286 = vld [vmem:[%s209 + $0x78] sm:$0xff]
        %v287 = vld [vmem:[%s185] sm:$0xff]
        %v288 = vld [vmem:[%s185 + $0x8] sm:$0xff]
        %v289 = vld [vmem:[%s185 + $0x10] sm:$0xff]
        %v290 = vld [vmem:[%s185 + $0x18] sm:$0xff]
        %v291 = vld [vmem:[%s185 + $0x20] sm:$0xff]
        %v292 = vld [vmem:[%s185 + $0x28] sm:$0xff]
        %v293 = vld [vmem:[%s185 + $0x30] sm:$0xff]
        %v294 = vld [vmem:[%s185 + $0x38] sm:$0xff]
        %v295 = vld [vmem:[%s185 + $0x40] sm:$0xff]
        %v296 = vld [vmem:[%s185 + $0x48] sm:$0xff]
        %v297 = vld [vmem:[%s185 + $0x50] sm:$0xff]
        %v298 = vld [vmem:[%s185 + $0x58] sm:$0xff]
        %v299 = vld [vmem:[%s185 + $0x60] sm:$0xff]
        %v300 = vld [vmem:[%s185 + $0x68] sm:$0xff]
        %v301 = vld [vmem:[%s185 + $0x70] sm:$0xff]
        %v302 = vld [vmem:[%s185 + $0x78] sm:$0xff]
        %v319 = vunpack.c.l.b16 %v287
        %v320 = vunpack.c.h.b16 %v287
        %v321 = vunpack.c.l.b16 %v288
        %v322 = vunpack.c.h.b16 %v288
        %v323 = vunpack.c.l.b16 %v289
        %v324 = vunpack.c.h.b16 %v289
        %v325 = vunpack.c.l.b16 %v290
        %v326 = vunpack.c.h.b16 %v290
        %v327 = vunpack.c.l.b16 %v291
        %v328 = vunpack.c.h.b16 %v291
        %v329 = vunpack.c.l.b16 %v292
        %v330 = vunpack.c.h.b16 %v292
        %v331 = vunpack.c.l.b16 %v293
        %v332 = vunpack.c.h.b16 %v293
        %v333 = vunpack.c.l.b16 %v294
        %v334 = vunpack.c.h.b16 %v294
        %v335 = vunpack.c.l.b16 %v295
        %v336 = vunpack.c.h.b16 %v295
        %v337 = vunpack.c.l.b16 %v296
        %v338 = vunpack.c.h.b16 %v296
        %v339 = vunpack.c.l.b16 %v297
        %v340 = vunpack.c.h.b16 %v297
        %v341 = vunpack.c.l.b16 %v298
        %v342 = vunpack.c.h.b16 %v298
        %v343 = vunpack.c.l.b16 %v299
        %v344 = vunpack.c.h.b16 %v299
        %v345 = vunpack.c.l.b16 %v300
        %v346 = vunpack.c.h.b16 %v300
        %v347 = vunpack.c.l.b16 %v301
        %v348 = vunpack.c.h.b16 %v301
        %v349 = vunpack.c.l.b16 %v302
        %v350 = vunpack.c.h.b16 %v302
        %v351 = vpack.c.b16 %v321, %v319
        %v352 = vpack.c.b16 %v322, %v320
        %v353 = vpack.c.b16 %v325, %v323
        %v354 = vpack.c.b16 %v326, %v324
        %v355 = vpack.c.b16 %v329, %v327
        %v356 = vpack.c.b16 %v330, %v328
        %v357 = vpack.c.b16 %v333, %v331
        %v358 = vpack.c.b16 %v334, %v332
        %v359 = vpack.c.b16 %v337, %v335
        %v360 = vpack.c.b16 %v338, %v336
        %v361 = vpack.c.b16 %v341, %v339
        %v362 = vpack.c.b16 %v342, %v340
        %v363 = vpack.c.b16 %v345, %v343
        %v364 = vpack.c.b16 %v346, %v344
        %v365 = vpack.c.b16 %v349, %v347
        %v366 = vpack.c.b16 %v350, %v348
        %v415 = vunpack.c.l.b16 %v239
        %v416 = vunpack.c.l.b16 %v240
        %v417 = vunpack.c.l.b16 %v241
        %v418 = vunpack.c.l.b16 %v242
        %v419 = vunpack.c.l.b16 %v243
        %v420 = vunpack.c.l.b16 %v244
        %v421 = vunpack.c.l.b16 %v245
        %v422 = vunpack.c.l.b16 %v246
        %v423 = vunpack.c.l.b16 %v247
        %v424 = vunpack.c.l.b16 %v248
        %v425 = vunpack.c.l.b16 %v249
        %v426 = vunpack.c.l.b16 %v250
        %v427 = vunpack.c.l.b16 %v251
        %v428 = vunpack.c.l.b16 %v252
        %v429 = vunpack.c.l.b16 %v253
        %v430 = vunpack.c.l.b16 %v254
        %v431 = vunpack.c.l.b16 %v255
        %v432 = vunpack.c.l.b16 %v256
        %v433 = vunpack.c.l.b16 %v257
        %v434 = vunpack.c.l.b16 %v258
        %v435 = vunpack.c.l.b16 %v259
        %v436 = vunpack.c.l.b16 %v260
        %v437 = vunpack.c.l.b16 %v261
        %v438 = vunpack.c.l.b16 %v262
        %v439 = vunpack.c.l.b16 %v263
        %v440 = vunpack.c.l.b16 %v264
        %v441 = vunpack.c.l.b16 %v265
        %v442 = vunpack.c.l.b16 %v266
        %v443 = vunpack.c.l.b16 %v267
        %v444 = vunpack.c.l.b16 %v268
        %v445 = vunpack.c.l.b16 %v269
        %v446 = vunpack.c.l.b16 %v270
        %v447 = vpack.c.b16 %v416, %v415
        %v448 = vpack.c.b16 %v418, %v417
        %v449 = vpack.c.b16 %v420, %v419
        %v450 = vpack.c.b16 %v422, %v421
        %v451 = vpack.c.b16 %v424, %v423
        %v452 = vpack.c.b16 %v426, %v425
        %v453 = vpack.c.b16 %v428, %v427
        %v454 = vpack.c.b16 %v430, %v429
        %v455 = vpack.c.b16 %v432, %v431
        %v456 = vpack.c.b16 %v434, %v433
        %v457 = vpack.c.b16 %v436, %v435
        %v458 = vpack.c.b16 %v438, %v437
        %v459 = vpack.c.b16 %v440, %v439
        %v460 = vpack.c.b16 %v442, %v441
        %v461 = vpack.c.b16 %v444, %v443
        %v462 = vpack.c.b16 %v446, %v445
        %479 = vmatprep.subr.bf16.mxu0 0
        %480 = vmatpush1.bf16.msra.mxu0 %v454
        %481 = vmatprep.subr.bf16.mxu0 0
        %482 = vmatpush1.bf16.msra.mxu0 %v453
        %483 = vmatprep.subr.bf16.mxu0 0
        %484 = vmatpush1.bf16.msra.mxu0 %v452
        %485 = vmatprep.subr.bf16.mxu0 0
        %486 = vmatpush1.bf16.msra.mxu0 %v451
        %487 = vmatprep.subr.bf16.mxu0 0
        %488 = vmatpush1.bf16.msra.mxu0 %v450
        %489 = vmatprep.subr.bf16.mxu0 0
        %490 = vmatpush1.bf16.msra.mxu0 %v449
        %491 = vmatprep.subr.bf16.mxu0 0
        %492 = vmatpush1.bf16.msra.mxu0 %v448
        %493 = vmatprep.subr.bf16.mxu0 0
        %494 = vmatpush1.bf16.msra.mxu0 %v447
        %495 = vmatprep.subr.bf16.mxu0 0
        %496 = vmatpush2.bf16.msra.mxu0 %v462
        %497 = vmatprep.subr.bf16.mxu0 0
        %498 = vmatpush2.bf16.msra.mxu0 %v461
        %499 = vmatprep.subr.bf16.mxu0 0
        %500 = vmatpush2.bf16.msra.mxu0 %v460
        %501 = vmatprep.subr.bf16.mxu0 0
        %502 = vmatpush2.bf16.msra.mxu0 %v459
        %503 = vmatprep.subr.bf16.mxu0 0
        %504 = vmatpush2.bf16.msra.mxu0 %v458
        %505 = vmatprep.subr.bf16.mxu0 0
        %506 = vmatpush2.bf16.msra.mxu0 %v457
        %507 = vmatprep.subr.bf16.mxu0 0
        %508 = vmatpush2.bf16.msra.mxu0 %v456
        %509 = vmatprep.subr.bf16.mxu0 0
        %510 = vmatpush2.bf16.msra.mxu0 %v455
        %511 = vmatprep.mubr.bf16.mxu0 %v352
        %512 = vmatmul.mubr.bf16.gmra.mxu0 %v351
        %v513 = vpop.f32.mrf.mxu0
        %v514 = vadd.f32 0.0, %v513
        %v515 = vpop.f32.mrf.mxu0
        %v516 = vpop.f32.mrf.mxu0
        %v517 = vadd.f32 0.0, %v516
        %v518 = vpop.f32.mrf.mxu0
        %519 = vmatprep.mubr.bf16.mxu0 %v354
        %520 = vmatmul.mubr.bf16.gmra.mxu0 %v353
        %v521 = vpop.f32.mrf.mxu0
        %v522 = vadd.f32 0.0, %v521
        %v523 = vpop.f32.mrf.mxu0
        %v524 = vpop.f32.mrf.mxu0
        %v525 = vadd.f32 0.0, %v524
        %v526 = vpop.f32.mrf.mxu0
        %527 = vmatprep.mubr.bf16.mxu0 %v356
        %528 = vmatmul.mubr.bf16.gmra.mxu0 %v355
        %v529 = vpop.f32.mrf.mxu0
        %v530 = vadd.f32 0.0, %v529
        %v531 = vpop.f32.mrf.mxu0
        %v532 = vpop.f32.mrf.mxu0
        %v533 = vadd.f32 0.0, %v532
        %v534 = vpop.f32.mrf.mxu0
        %535 = vmatprep.mubr.bf16.mxu0 %v358
        %536 = vmatmul.mubr.bf16.gmra.mxu0 %v357
        %v537 = vpop.f32.mrf.mxu0
        %v538 = vadd.f32 0.0, %v537
        %v539 = vpop.f32.mrf.mxu0
        %v540 = vpop.f32.mrf.mxu0
        %v541 = vadd.f32 0.0, %v540
        %v542 = vpop.f32.mrf.mxu0
        %543 = vmatprep.mubr.bf16.mxu0 %v360
        %544 = vmatmul.mubr.bf16.gmra.mxu0 %v359
        %v545 = vpop.f32.mrf.mxu0
        %v546 = vadd.f32 0.0, %v545
        %v547 = vpop.f32.mrf.mxu0
        %v548 = vpop.f32.mrf.mxu0
        %v549 = vadd.f32 0.0, %v548
        %v550 = vpop.f32.mrf.mxu0
        %551 = vmatprep.mubr.bf16.mxu0 %v362
        %552 = vmatmul.mubr.bf16.gmra.mxu0 %v361
        %v553 = vpop.f32.mrf.mxu0
        %v554 = vadd.f32 0.0, %v553
        %v555 = vpop.f32.mrf.mxu0
        %v556 = vpop.f32.mrf.mxu0
        %v557 = vadd.f32 0.0, %v556
        %v558 = vpop.f32.mrf.mxu0
        %559 = vmatprep.mubr.bf16.mxu0 %v364
        %560 = vmatmul.mubr.bf16.gmra.mxu0 %v363
        %v561 = vpop.f32.mrf.mxu0
        %v562 = vadd.f32 0.0, %v561
        %v563 = vpop.f32.mrf.mxu0
        %v564 = vpop.f32.mrf.mxu0
        %v565 = vadd.f32 0.0, %v564
        %v566 = vpop.f32.mrf.mxu0
        %567 = vmatprep.mubr.bf16.mxu0 %v366
        %568 = vmatmul.mubr.bf16.gmra.mxu0 %v365
        %v569 = vpop.f32.mrf.mxu0
        %v570 = vadd.f32 0.0, %v569
        %v571 = vpop.f32.mrf.mxu0
        %v572 = vpop.f32.mrf.mxu0
        %v573 = vadd.f32 0.0, %v572
        %v574 = vpop.f32.mrf.mxu0
        %575 = vdwg.mxu0
        %v576 = vadd.f32 %v271, %v514
        %v577 = vadd.f32 %v272, %v517
        %v578 = vadd.f32 %v273, %v522
        %v579 = vadd.f32 %v274, %v525
        %v580 = vadd.f32 %v275, %v530
        %v581 = vadd.f32 %v276, %v533
        %v582 = vadd.f32 %v277, %v538
        %v583 = vadd.f32 %v278, %v541
        %v584 = vadd.f32 %v279, %v546
        %v585 = vadd.f32 %v280, %v549
        %v586 = vadd.f32 %v281, %v554
        %v587 = vadd.f32 %v282, %v557
        %v588 = vadd.f32 %v283, %v562
        %v589 = vadd.f32 %v284, %v565
        %v590 = vadd.f32 %v285, %v570
        %v591 = vadd.f32 %v286, %v573
        %592 = vst [vmem:[%s209] sm:$0xff] %v576
        %593 = vst [vmem:[%s209 + $0x8] sm:$0xff] %v577
        %594 = vst [vmem:[%s209 + $0x10] sm:$0xff] %v578
        %595 = vst [vmem:[%s209 + $0x18] sm:$0xff] %v579
        %596 = vst [vmem:[%s209 + $0x20] sm:$0xff] %v580
        %597 = vst [vmem:[%s209 + $0x28] sm:$0xff] %v581
        %598 = vst [vmem:[%s209 + $0x30] sm:$0xff] %v582
        %599 = vst [vmem:[%s209 + $0x38] sm:$0xff] %v583
        %600 = vst [vmem:[%s209 + $0x40] sm:$0xff] %v584
        %601 = vst [vmem:[%s209 + $0x48] sm:$0xff] %v585
        %602 = vst [vmem:[%s209 + $0x50] sm:$0xff] %v586
        %603 = vst [vmem:[%s209 + $0x58] sm:$0xff] %v587
        %604 = vst [vmem:[%s209 + $0x60] sm:$0xff] %v588
        %605 = vst [vmem:[%s209 + $0x68] sm:$0xff] %v589
        %606 = vst [vmem:[%s209 + $0x70] sm:$0xff] %v590
        %607 = vst [vmem:[%s209 + $0x78] sm:$0xff] %v591
        %s608 = sand.u32 %s103, 1
        %s609 = scalar_lea.sflag [#allocation4], %s608
        %s610 = sand.u32 %s103, 1
        %s611 = smul.addr %s610, 128
        %s612 = scalar_lea.vmem [#allocation7], %s611
        // Predicated region
        $region41: #{tpu_custom_call.1} parent=27 // pred_check
          %p613 = pneg %p113
        $region42: #{tpu_custom_call.1} parent=27 // pred_check_branch
          %615 = sbr.rel (%p613) target = $region44
        $region43: #{tpu_custom_call.1} parent=27 // pred_region
          %s616 = smul.u32 16, %s25
          %s618 = ssub.s32 2048, 2048
          %619 = vsyncadd %s609, %s618
          %s620 = sadd.s32 %s26, %s616
          %s621 = smul.addr %s620, 128
          %s622 = scalar_lea.hbm %s2, %s621
          %s623 = sshll.u32 %s612, 4
          %s624 = int_to_ptr.vmem [resolvable:$true] %s623
          %629 = dma.vmem_to_hbm [thread:$0]  %s624, 2048, %s622, %s609, 128, 128, 8
        $region44: #{tpu_custom_call.1} parent=27 // pred_fallthru
          _
      $region28: #{tpu_custom_call.1} parent=5 // pred_fallthru
        _
      %p630 = scmp.le.s32.totalorder 2, %s15
      // Predicated region
      $region45: #{tpu_custom_call.1} parent=5 // pred_check
        %p631 = pneg %p630
      $region46: #{tpu_custom_call.1} parent=5 // pred_check_branch
        %633 = sbr.rel (%p631) target = $region48
      $region47: #{tpu_custom_call.1} parent=5 // pred_region
        %s634 = ssub.s32 %s15, 2
        // Predicated region
        $region49: #{tpu_custom_call.1} parent=47 // pred_check
          %p635 = pneg %p119
        $region50: #{tpu_custom_call.1} parent=47 // pred_check_branch
          %637 = sbr.rel (%p635) target = $region52
        $region51: #{tpu_custom_call.1} parent=47 // pred_region
          %s638 = sand.u32 %s104, 1
          %s639 = scalar_lea.sflag [#allocation4], %s638
          %s640 = sand.u32 %s104, 1
          %s641 = smul.addr %s640, 128
          %s642 = scalar_lea.vmem [#allocation7], %s641
          %643 = dma.done %s639, 2048
        $region52: #{tpu_custom_call.1} parent=47 // pred_fallthru
          _
      $region48: #{tpu_custom_call.1} parent=5 // pred_fallthru
        _
    $region6: #{tpu_custom_call.1} parent=1 // loop_footer
      %s19 = sadd.s32 1, %s15
    $region7: #{tpu_custom_call.1} parent=1 // loop_footer_branch
      %14 = sbr.rel target = $region3
    $region8: #{tpu_custom_call.1} parent=1 // loop_exit
      _
    %644 = vsyncpa [#allocation3], 1
    %s645 = scalar_lea.sflag [#allocation3], 1
    %646 = vsyncpa %s645, 1
    %647 = vsyncpa [#allocation6], 1
    %648 = vsyncpa [#allocation4], 1
    %s649 = scalar_lea.sflag [#allocation4], 1
    %650 = vsyncpa %s649, 1

</llo_original>
